<compile_context>
chip_gen: v7x
topology: tpu7x:2x2x1
jax: 0.10.0
libtpu: 0.0.40
codegen_flags: <defaults>
</compile_context>

<pallas_src>
import jax
import jax.numpy as jnp
import numpy as np
from jax import lax
from jax.experimental import pallas as pl
from jax.experimental.pallas import tpu as pltpu


_HEAD_OUT_CHANNELS = {
    "heatmap": 3,
    "offset_2d_left": 2,
    "size_2d_left": 2,
    "offset_2d_right": 2,
    "width_right": 1,
}
_OC_PAD = 16  # pad total output channels (10) up to a full f32 sublane pair


def _det_head_fused_kernel(patch_ref, w1t_ref, b1_ref, w2t_ref, b2_ref, o_ref):
    """All five detection-head branches, pure-MXU body.

    patch_ref : (9*C, L)        bf16  im2col patch matrix (built in wrapper)
    w1t_ref   : (HC_tot, 9*C)   bf16  fused 3x3 conv weights (transposed)
    b1_ref    : (HC_tot, 1)     f32
    w2t_ref   : (OC_PAD, HC_tot) bf16 block-diagonal 1x1 conv weights (T, padded)
    b2_ref    : (OC_PAD, 1)     f32
    o_ref     : (OC_PAD, L)     f32   channel-major output
    """
    # Fused 3x3 conv (+bias, ReLU): single K = 9*C matmul, lanes on MXU-N.
    hidden = jnp.dot(w1t_ref[...], patch_ref[...],
                     preferred_element_type=jnp.float32)        # (HC_tot, L)
    hidden = jnp.maximum(hidden + b1_ref[...], 0.0)

    # All five 1x1 convs at once via the block-diagonal weight matrix.
    out = jnp.dot(w2t_ref[...], hidden.astype(w2t_ref.dtype),
                  preferred_element_type=jnp.float32)            # (OC_PAD, L)
    o_ref[...] = out + b2_ref[...]


def build_fused_params(params):
    """One-time fusion of the 5 heads into a single weight set (call at init).

    Iterates _HEAD_OUT_CHANNELS explicitly so the result does not depend on
    the insertion order of `params`.
    Returns (w1t bf16, b1 f32, w2t bf16, b2 f32) with OC padded to _OC_PAD.
    """
    names = list(_HEAD_OUT_CHANNELS.keys())
    w1_list = [params[n][0] for n in names]     # each (3, 3, C, HC)  (HWIO)
    b1_list = [params[n][1] for n in names]     # each (HC,)
    w2_list = [params[n][2] for n in names]     # each (HC, OC)
    b2_list = [params[n][3] for n in names]     # each (OC,)

    C = w1_list[0].shape[2]
    w1_big = jnp.concatenate(w1_list, axis=-1)                  # (3,3,C,HC_tot)
    hc_tot = w1_big.shape[-1]
    # (HC_tot, dy, dx, cin) -> (HC_tot, 9C); matches the wrapper's tap order.
    w1t = jnp.transpose(w1_big, (3, 0, 1, 2)).reshape(hc_tot, 9 * C)
    b1 = jnp.concatenate(b1_list).reshape(hc_tot, 1)

    oc_tot = sum(int(w.shape[1]) for w in w2_list)
    # Block-diagonal w2^T (padded to _OC_PAD rows): off-diagonal blocks are
    # explicit zeros so each head stays independent.
    w2t = jnp.zeros((_OC_PAD, hc_tot), jnp.float32)
    r = c = 0
    for w2 in w2_list:
        hc, oc = w2.shape
        w2t = w2t.at[r:r + oc, c:c + hc].set(w2.T)
        r += oc
        c += hc
    b2 = jnp.zeros((_OC_PAD, 1), jnp.float32)
    b2 = b2.at[:oc_tot, 0].set(jnp.concatenate(b2_list))

    return (w1t.astype(jnp.bfloat16), b1.astype(jnp.float32),
            w2t.astype(jnp.bfloat16), b2.astype(jnp.float32))


def _multi_tensorcore_device():
    """True on chips with >1 TensorCore sharing HBM (v7x); False on v5e/v6e."""
    try:
        kind = jax.devices()[0].device_kind.lower()
    except Exception:
        return False
    return ("v7" in kind) or ("7x" in kind)


def det_head_forward(feat_nchw, fused):
    """Forward pass matching DetHead.forward.

    feat_nchw : (N, C, H, W) float array
    fused     : output of build_fused_params (precomputed once)
    Returns a dict of NCHW outputs, one entry per head.
    """
    w1t, b1, w2t, b2 = fused
    N, C, H, W = feat_nchw.shape
    HW = H * W
    hc_tot = w1t.shape[0]
    oc_tot = sum(_HEAD_OUT_CHANNELS.values())

    # --- wrapper-side im2col, in bf16 ---------------------------------------
    # patch column index = n*HW + y*W + x ; row index = (dy*3+dx)*C + cin,
    # matching the (dy, dx, cin) layout of w1t's columns.
    x = feat_nchw.astype(jnp.bfloat16)
    x_pad = jnp.pad(x, ((0, 0), (0, 0), (1, 1), (1, 1)))        # (N,C,H+2,W+2)
    taps = [x_pad[:, :, dy:dy + H, dx:dx + W]
            for dy in range(3) for dx in range(3)]               # 9 x (N,C,H,W)
    patch = jnp.stack(taps, axis=1).reshape(N, 9 * C, HW)        # (N, 9C, HW)
    patch = jnp.transpose(patch, (1, 0, 2)).reshape(9 * C, N * HW)

    # --- batch mapping: parallel grid on multi-TC chips, lane-merge otherwise
    if _multi_tensorcore_device() and N > 1:
        num_steps = N            # v7x: one image per TensorCore
    else:
        num_steps = 1            # v5e/v6e: fold batch into the lane axis
    L = (N * HW) // num_steps    # lanes per step (multiple of 128)

    out_flat = pl.pallas_call(
        _det_head_fused_kernel,
        out_shape=jax.ShapeDtypeStruct((_OC_PAD, N * HW), jnp.float32),
        grid_spec=pltpu.PrefetchScalarGridSpec(
            num_scalar_prefetch=0,
            grid=(num_steps,),
            in_specs=[
                pl.BlockSpec((9 * C, L), lambda n: (0, n)),
                pl.BlockSpec((hc_tot, 9 * C), lambda n: (0, 0)),
                pl.BlockSpec((hc_tot, 1), lambda n: (0, 0)),
                pl.BlockSpec((_OC_PAD, hc_tot), lambda n: (0, 0)),
                pl.BlockSpec((_OC_PAD, 1), lambda n: (0, 0)),
            ],
            out_specs=pl.BlockSpec((_OC_PAD, L), lambda n: (0, n)),
        ),
        compiler_params=pltpu.CompilerParams(
            dimension_semantics=("parallel",)),
    )(patch, w1t, b1, w2t, b2)

    # Channel-major -> NCHW (drop the zero-padded channels), then split heads.
    y = out_flat[:oc_tot].reshape(oc_tot, N, H, W).transpose(1, 0, 2, 3)
    ret = {}
    off = 0
    for name, oc in _HEAD_OUT_CHANNELS.items():
        ret[name] = y[:, off:off + oc]
        off += oc
    return ret


def init_params(key, channels, head_conv):
    """Deterministic synthetic init (std=0.001 normal, zero bias; heatmap's
    final bias filled with -2.19 as in the PyTorch module)."""
    params = {}
    for i, (name, oc) in enumerate(_HEAD_OUT_CHANNELS.items()):
        k1, k2 = jax.random.split(jax.random.fold_in(key, i))
        w1 = 0.001 * jax.random.normal(k1, (3, 3, channels, head_conv),
                                       dtype=jnp.float32)
        b1 = jnp.zeros((head_conv,), jnp.float32)
        w2 = 0.001 * jax.random.normal(k2, (head_conv, oc), dtype=jnp.float32)
        if name == "heatmap":
            b2 = jnp.full((oc,), -2.19, jnp.float32)
        else:
            b2 = jnp.zeros((oc,), jnp.float32)
        params[name] = (w1, b1, w2, b2)
    return params


def _reference_branch(x_nchw, w1, b1, w2, b2):
    """Plain-JAX (f32) reference via lax.conv for the correctness check."""
    dn = ("NCHW", "HWIO", "NCHW")
    h = lax.conv_general_dilated(x_nchw, w1, (1, 1), "SAME",
                                 dimension_numbers=dn)
    h = jnp.maximum(h + b1.reshape(1, -1, 1, 1), 0.0)
    o = lax.conv_general_dilated(h, w2.reshape(1, 1, *w2.shape), (1, 1),
                                 "SAME", dimension_numbers=dn)
    return o + b2.reshape(1, -1, 1, 1)


if __name__ == "__main__":
    # Small, module-consistent shapes (H*W = 256 keeps the lane axis dense).
    N, C, H, W = 2, 32, 16, 16
    head_conv = 32

    key = jax.random.PRNGKey(0)
    feat = jax.random.normal(jax.random.fold_in(key, 123),
                             (N, C, H, W), dtype=jnp.float32)
    params = init_params(key, C, head_conv)

    # One-time weight fusion (hoisted out of the per-call path).
    fused = jax.tree_util.tree_map(jax.block_until_ready,
                                   build_fused_params(params))

    fwd = jax.jit(det_head_forward)
    out = fwd(feat, fused)
    out = jax.tree_util.tree_map(jax.block_until_ready, out)

    # Correctness vs a plain-JAX f32 reference.  The kernel feeds bf16 operands
    # to the MXU (f32 accumulation), so tolerances are set accordingly.
    for name, (w1, b1, w2, b2) in params.items():
        ref = _reference_branch(feat, w1, b1, w2, b2)
        assert out[name].shape == ref.shape
        np.testing.assert_allclose(np.asarray(out[name]), np.asarray(ref),
                                   rtol=2e-3, atol=2e-4)

    print("KERNEL_OK")
</pallas_src>

<mosaic_0001>
module attributes {stable_mosaic.version = 11 : i64} {
  func.func @_det_head_fused_kernel(%arg0: i32, %arg1: memref<288x512xbf16, #tpu.memory_space<vmem>>, %arg2: memref<160x288xbf16, #tpu.memory_space<vmem>>, %arg3: memref<160x1xf32, #tpu.memory_space<vmem>>, %arg4: memref<16x160xbf16, #tpu.memory_space<vmem>>, %arg5: memref<16x1xf32, #tpu.memory_space<vmem>>, %arg6: memref<16x512xf32, #tpu.memory_space<vmem>>) attributes {dimension_semantics = [#tpu.dimension_semantics<parallel>], iteration_bounds = array<i64: 1>, scalar_prefetch = 0 : i64, scratch_operands = 0 : i64, tpu.core_type = #tpu.core_type<tc>, window_params = [{transform_indices = @transform_0, window_bounds = array<i64: 288, 512>}, {pipeline_mode = #tpu.pipeline_mode<synchronous>, transform_indices = @transform_1, window_bounds = array<i64: 160, 288>}, {pipeline_mode = #tpu.pipeline_mode<synchronous>, transform_indices = @transform_2, window_bounds = array<i64: 160, 1>}, {pipeline_mode = #tpu.pipeline_mode<synchronous>, transform_indices = @transform_3, window_bounds = array<i64: 16, 160>}, {pipeline_mode = #tpu.pipeline_mode<synchronous>, transform_indices = @transform_4, window_bounds = array<i64: 16, 1>}, {transform_indices = @transform_5, window_bounds = array<i64: 16, 512>}]} {
    %c0 = arith.constant 0 : index
    %c0_0 = arith.constant 0 : index
    %0 = vector.load %arg2[%c0, %c0_0] : memref<160x288xbf16, #tpu.memory_space<vmem>>, vector<160x288xbf16>
    %c0_1 = arith.constant 0 : index
    %c0_2 = arith.constant 0 : index
    %1 = vector.load %arg1[%c0_1, %c0_2] : memref<288x512xbf16, #tpu.memory_space<vmem>>, vector<288x512xbf16>
    %cst = arith.constant dense<0.000000e+00> : vector<160x512xf32>
    %2 = tpu.matmul %0, %1, %cst {dimension_numbers = #tpu.dot_dimension_numbers<[1], [0], [0], [1], [0, 0, 1, 1], [], []>} : vector<160x288xbf16>, vector<288x512xbf16>, vector<160x512xf32> -> vector<160x512xf32>
    %c0_3 = arith.constant 0 : index
    %c0_4 = arith.constant 0 : index
    %3 = vector.load %arg3[%c0_3, %c0_4] : memref<160x1xf32, #tpu.memory_space<vmem>>, vector<160x1xf32>
    %4 = vector.broadcast %3 : vector<160x1xf32> to vector<160x512xf32>
    %5 = arith.addf %2, %4 : vector<160x512xf32>
    %cst_5 = arith.constant 0.000000e+00 : f32
    %6 = vector.broadcast %cst_5 : f32 to vector<160x512xf32>
    %7 = arith.maximumf %5, %6 : vector<160x512xf32>
    %c0_6 = arith.constant 0 : index
    %c0_7 = arith.constant 0 : index
    %8 = vector.load %arg4[%c0_6, %c0_7] : memref<16x160xbf16, #tpu.memory_space<vmem>>, vector<16x160xbf16>
    %9 = arith.truncf %7 : vector<160x512xf32> to vector<160x512xbf16>
    %cst_8 = arith.constant dense<0.000000e+00> : vector<16x512xf32>
    %10 = tpu.matmul %8, %9, %cst_8 {dimension_numbers = #tpu.dot_dimension_numbers<[1], [0], [0], [1], [0, 0, 1, 1], [], []>} : vector<16x160xbf16>, vector<160x512xbf16>, vector<16x512xf32> -> vector<16x512xf32>
    %c0_9 = arith.constant 0 : index
    %c0_10 = arith.constant 0 : index
    %11 = vector.load %arg5[%c0_9, %c0_10] : memref<16x1xf32, #tpu.memory_space<vmem>>, vector<16x1xf32>
    %12 = vector.broadcast %11 : vector<16x1xf32> to vector<16x512xf32>
    %13 = arith.addf %10, %12 : vector<16x512xf32>
    %c0_11 = arith.constant 0 : index
    %c0_12 = arith.constant 0 : index
    %14 = vector.load %arg6[%c0_11, %c0_12] : memref<16x512xf32, #tpu.memory_space<vmem>>, vector<16x512xf32>
    tpu.vector_store %arg6[%c0_11, %c0_12], %13 {strides = array<i32>} : memref<16x512xf32, #tpu.memory_space<vmem>>, vector<16x512xf32>,
    return
  }
  func.func @transform_0(%arg0: i32) -> (i32, i32) {
    %c0_i32 = arith.constant 0 : i32
    %c0_i32_0 = arith.constant 0 : i32
    return %c0_i32, %arg0 : i32, i32
  }
  func.func @transform_1(%arg0: i32) -> (i32, i32) {
    %c0_i32 = arith.constant 0 : i32
    %c0_i32_0 = arith.constant 0 : i32
    %c0_i32_1 = arith.constant 0 : i32
    return %c0_i32, %c0_i32_0 : i32, i32
  }
  func.func @transform_2(%arg0: i32) -> (i32, i32) {
    %c0_i32 = arith.constant 0 : i32
    %c0_i32_0 = arith.constant 0 : i32
    %c0_i32_1 = arith.constant 0 : i32
    return %c0_i32, %c0_i32_0 : i32, i32
  }
  func.func @transform_3(%arg0: i32) -> (i32, i32) {
    %c0_i32 = arith.constant 0 : i32
    %c0_i32_0 = arith.constant 0 : i32
    %c0_i32_1 = arith.constant 0 : i32
    return %c0_i32, %c0_i32_0 : i32, i32
  }
  func.func @transform_4(%arg0: i32) -> (i32, i32) {
    %c0_i32 = arith.constant 0 : i32
    %c0_i32_0 = arith.constant 0 : i32
    %c0_i32_1 = arith.constant 0 : i32
    return %c0_i32, %c0_i32_0 : i32, i32
  }
  func.func @transform_5(%arg0: i32) -> (i32, i32) {
    %c0_i32 = arith.constant 0 : i32
    %c0_i32_0 = arith.constant 0 : i32
    return %c0_i32, %arg0 : i32, i32
  }
}

</mosaic_0001>

<llo_original>
// kernel: det_head_forward.1
$region0: #{det_head_forward.1}
  #allocation0 [shape = 'u32[]', space=smem, size = 0x4, offset = 0x4, fixed_abs, tag = 'smem constant byte address 0x4 - core index']
  #allocation1 [shape = 'u32[144,128]{1,0:T(1,128)}', space=vmem, size = 0x12000, scoped, tag = 'internal scratch']
  %s0 = inlined_call_operand.vmem [shape: bf16[288,512], index: 0, kind: input, shape index: {}]
  %s1 = inlined_call_operand.vmem [shape: bf16[160,288], index: 1, kind: input, shape index: {}]
  %s2 = inlined_call_operand.vmem [shape: f32[160,1], index: 2, kind: input, shape index: {}]
  %s3 = inlined_call_operand.vmem [shape: bf16[16,160], index: 3, kind: input, shape index: {}]
  %s4 = inlined_call_operand.vmem [shape: f32[16,1], index: 4, kind: input, shape index: {}]
  %s5 = inlined_call_operand.vmem [shape: f32[16,512], index: 5, kind: output, shape index: {}]
  %s6 = sld [smem:[#allocation0]]
  $region30: #{det_head_forward.1} parent=0
    _
  %s8 = ssub.s32 1, %s6
  %s9 = scalar_select 0, %s8, %s6
  // Predicated region
  $region2: #{det_head_forward.1} parent=0 // pred_check
    _
  $region3: #{det_head_forward.1} parent=0 // pred_check_branch
    %11 = sbr.rel (0) target = $region5
  $region4: #{det_head_forward.1} parent=0 // pred_region
    _
  $region5: #{det_head_forward.1} parent=0 // pred_fallthru
    _
  // Predicated region
  $region6: #{det_head_forward.1} parent=0 // pred_check
    _
  $region7: #{det_head_forward.1} parent=0 // pred_check_branch
    %13 = sbr.rel (0) target = $region9
  $region8: #{det_head_forward.1} parent=0 // pred_region
    _
  $region9: #{det_head_forward.1} parent=0 // pred_fallthru
    _
  // Predicated region
  $region10: #{det_head_forward.1} parent=0 // pred_check
    _
  $region11: #{det_head_forward.1} parent=0 // pred_check_branch
    %15 = sbr.rel (0) target = $region13
  $region12: #{det_head_forward.1} parent=0 // pred_region
    _
  $region13: #{det_head_forward.1} parent=0 // pred_fallthru
    _
  // Predicated region
  $region14: #{det_head_forward.1} parent=0 // pred_check
    _
  $region15: #{det_head_forward.1} parent=0 // pred_check_branch
    %17 = sbr.rel (0) target = $region17
  $region16: #{det_head_forward.1} parent=0 // pred_region
    _
  $region17: #{det_head_forward.1} parent=0 // pred_fallthru
    _
  // Predicated region
  $region18: #{det_head_forward.1} parent=0 // pred_check
    _
  $region19: #{det_head_forward.1} parent=0 // pred_check_branch
    %19 = sbr.rel (0) target = $region21
  $region20: #{det_head_forward.1} parent=0 // pred_region
    _
  $region21: #{det_head_forward.1} parent=0 // pred_fallthru
    _
  %v21 = vld [vmem:[%s1] sm:$0xff]
  %v22 = vld [vmem:[%s1 + $0x8] sm:$0xf]
  %v23 = vld [vmem:[%s1 + $0xc] sm:$0xff]
  %v24 = vld [vmem:[%s1 + $0x14] sm:$0xf]
  %v25 = vld [vmem:[%s1 + $0x18] sm:$0xff]
  %v26 = vld [vmem:[%s1 + $0x20] sm:$0xf]
  %v27 = vld [vmem:[%s1 + $0x24] sm:$0xff]
  %v28 = vld [vmem:[%s1 + $0x2c] sm:$0xf]
  %v29 = vld [vmem:[%s1 + $0x30] sm:$0xff]
  %v30 = vld [vmem:[%s1 + $0x38] sm:$0xf]
  %v31 = vld [vmem:[%s1 + $0x3c] sm:$0xff]
  %v32 = vld [vmem:[%s1 + $0x44] sm:$0xf]
  %v33 = vld [vmem:[%s1 + $0x48] sm:$0xff]
  %v34 = vld [vmem:[%s1 + $0x50] sm:$0xf]
  %v35 = vld [vmem:[%s1 + $0x54] sm:$0xff]
  %v36 = vld [vmem:[%s1 + $0x5c] sm:$0xf]
  %v37 = vld [vmem:[%s1 + $0x60] sm:$0xff]
  %v38 = vld [vmem:[%s1 + $0x68] sm:$0xf]
  %v39 = vld [vmem:[%s1 + $0x6c] sm:$0xff]
  %v40 = vld [vmem:[%s1 + $0x74] sm:$0xf]
  %v41 = vld [vmem:[%s1 + $0x78] sm:$0xff]
  %v42 = vld [vmem:[%s1 + $0x80] sm:$0xf]
  %v43 = vld [vmem:[%s1 + $0x84] sm:$0xff]
  %v44 = vld [vmem:[%s1 + $0x8c] sm:$0xf]
  %v45 = vld [vmem:[%s1 + $0x90] sm:$0xff]
  %v46 = vld [vmem:[%s1 + $0x98] sm:$0xf]
  %v47 = vld [vmem:[%s1 + $0x9c] sm:$0xff]
  %v48 = vld [vmem:[%s1 + $0xa4] sm:$0xf]
  %v49 = vld [vmem:[%s1 + $0xa8] sm:$0xff]
  %v50 = vld [vmem:[%s1 + $0xb0] sm:$0xf]
  %v51 = vld [vmem:[%s1 + $0xb4] sm:$0xff]
  %v52 = vld [vmem:[%s1 + $0xbc] sm:$0xf]
  %v53 = vld [vmem:[%s1 + $0xc0] sm:$0xff]
  %v54 = vld [vmem:[%s1 + $0xc8] sm:$0xf]
  %v55 = vld [vmem:[%s1 + $0xcc] sm:$0xff]
  %v56 = vld [vmem:[%s1 + $0xd4] sm:$0xf]
  %v57 = vld [vmem:[%s1 + $0xd8] sm:$0xff]
  %v58 = vld [vmem:[%s1 + $0xe0] sm:$0xf]
  %v59 = vld [vmem:[%s1 + $0xe4] sm:$0xff]
  %v60 = vld [vmem:[%s1 + $0xec] sm:$0xf]
  %v61 = vld [vmem:[%s0] sm:$0xff]
  %v62 = vld [vmem:[%s0 + $0x8] sm:$0xff]
  %v63 = vld [vmem:[%s0 + $0x10] sm:$0xff]
  %v64 = vld [vmem:[%s0 + $0x18] sm:$0xff]
  %v65 = vld [vmem:[%s0 + $0x20] sm:$0xff]
  %v66 = vld [vmem:[%s0 + $0x28] sm:$0xff]
  %v67 = vld [vmem:[%s0 + $0x30] sm:$0xff]
  %v68 = vld [vmem:[%s0 + $0x38] sm:$0xff]
  %v69 = vld [vmem:[%s0 + $0x40] sm:$0xff]
  %v70 = vld [vmem:[%s0 + $0x48] sm:$0xff]
  %v71 = vld [vmem:[%s0 + $0x50] sm:$0xff]
  %v72 = vld [vmem:[%s0 + $0x58] sm:$0xff]
  %v73 = vld [vmem:[%s0 + $0x60] sm:$0xff]
  %v74 = vld [vmem:[%s0 + $0x68] sm:$0xff]
  %v75 = vld [vmem:[%s0 + $0x70] sm:$0xff]
  %v76 = vld [vmem:[%s0 + $0x78] sm:$0xff]
  %v77 = vld [vmem:[%s0 + $0x80] sm:$0xff]
  %v78 = vld [vmem:[%s0 + $0x88] sm:$0xff]
  %v79 = vld [vmem:[%s0 + $0x90] sm:$0xff]
  %v80 = vld [vmem:[%s0 + $0x98] sm:$0xff]
  %v81 = vld [vmem:[%s0 + $0xa0] sm:$0xff]
  %v82 = vld [vmem:[%s0 + $0xa8] sm:$0xff]
  %v83 = vld [vmem:[%s0 + $0xb0] sm:$0xff]
  %v84 = vld [vmem:[%s0 + $0xb8] sm:$0xff]
  %v85 = vld [vmem:[%s0 + $0xc0] sm:$0xff]
  %v86 = vld [vmem:[%s0 + $0xc8] sm:$0xff]
  %v87 = vld [vmem:[%s0 + $0xd0] sm:$0xff]
  %v88 = vld [vmem:[%s0 + $0xd8] sm:$0xff]
  %v89 = vld [vmem:[%s0 + $0xe0] sm:$0xff]
  %v90 = vld [vmem:[%s0 + $0xe8] sm:$0xff]
  %v91 = vld [vmem:[%s0 + $0xf0] sm:$0xff]
  %v92 = vld [vmem:[%s0 + $0xf8] sm:$0xff]
  %v93 = vld [vmem:[%s0 + $0x100] sm:$0xff]
  %v94 = vld [vmem:[%s0 + $0x108] sm:$0xff]
  %v95 = vld [vmem:[%s0 + $0x110] sm:$0xff]
  %v96 = vld [vmem:[%s0 + $0x118] sm:$0xff]
  %v97 = vld [vmem:[%s0 + $0x120] sm:$0xff]
  %v98 = vld [vmem:[%s0 + $0x128] sm:$0xff]
  %v99 = vld [vmem:[%s0 + $0x130] sm:$0xff]
  %v100 = vld [vmem:[%s0 + $0x138] sm:$0xff]
  %v101 = vld [vmem:[%s0 + $0x140] sm:$0xff]
  %v102 = vld [vmem:[%s0 + $0x148] sm:$0xff]
  %v103 = vld [vmem:[%s0 + $0x150] sm:$0xff]
  %v104 = vld [vmem:[%s0 + $0x158] sm:$0xff]
  %v105 = vld [vmem:[%s0 + $0x160] sm:$0xff]
  %v106 = vld [vmem:[%s0 + $0x168] sm:$0xff]
  %v107 = vld [vmem:[%s0 + $0x170] sm:$0xff]
  %v108 = vld [vmem:[%s0 + $0x178] sm:$0xff]
  %v109 = vld [vmem:[%s0 + $0x180] sm:$0xff]
  %v110 = vld [vmem:[%s0 + $0x188] sm:$0xff]
  %v111 = vld [vmem:[%s0 + $0x190] sm:$0xff]
  %v112 = vld [vmem:[%s0 + $0x198] sm:$0xff]
  %v113 = vld [vmem:[%s0 + $0x1a0] sm:$0xff]
  %v114 = vld [vmem:[%s0 + $0x1a8] sm:$0xff]
  %v115 = vld [vmem:[%s0 + $0x1b0] sm:$0xff]
  %v116 = vld [vmem:[%s0 + $0x1b8] sm:$0xff]
  %v117 = vld [vmem:[%s0 + $0x1c0] sm:$0xff]
  %v118 = vld [vmem:[%s0 + $0x1c8] sm:$0xff]
  %v119 = vld [vmem:[%s0 + $0x1d0] sm:$0xff]
  %v120 = vld [vmem:[%s0 + $0x1d8] sm:$0xff]
  %v121 = vld [vmem:[%s0 + $0x1e0] sm:$0xff]
  %v122 = vld [vmem:[%s0 + $0x1e8] sm:$0xff]
  %v123 = vld [vmem:[%s0 + $0x1f0] sm:$0xff]
  %v124 = vld [vmem:[%s0 + $0x1f8] sm:$0xff]
  %v125 = vld [vmem:[%s0 + $0x200] sm:$0xff]
  %v126 = vld [vmem:[%s0 + $0x208] sm:$0xff]
  %v127 = vld [vmem:[%s0 + $0x210] sm:$0xff]
  %v128 = vld [vmem:[%s0 + $0x218] sm:$0xff]
  %v129 = vld [vmem:[%s0 + $0x220] sm:$0xff]
  %v130 = vld [vmem:[%s0 + $0x228] sm:$0xff]
  %v131 = vld [vmem:[%s0 + $0x230] sm:$0xff]
  %v132 = vld [vmem:[%s0 + $0x238] sm:$0xff]
  %v133 = vld [vmem:[%s2] sm:$0xff]
  %v134 = vld [vmem:[%s2 + $0x8] sm:$0xff]
  %v135 = vld [vmem:[%s2 + $0x10] sm:$0xff]
  %v136 = vld [vmem:[%s2 + $0x18] sm:$0xff]
  %v137 = vld [vmem:[%s2 + $0x20] sm:$0xff]
  %v138 = vld [vmem:[%s2 + $0x28] sm:$0xff]
  %v139 = vld [vmem:[%s2 + $0x30] sm:$0xff]
  %v140 = vld [vmem:[%s2 + $0x38] sm:$0xff]
  %v141 = vld [vmem:[%s2 + $0x40] sm:$0xff]
  %v142 = vld [vmem:[%s2 + $0x48] sm:$0xff]
  %v143 = vld [vmem:[%s2 + $0x50] sm:$0xff]
  %v144 = vld [vmem:[%s2 + $0x58] sm:$0xff]
  %v145 = vld [vmem:[%s2 + $0x60] sm:$0xff]
  %v146 = vld [vmem:[%s2 + $0x68] sm:$0xff]
  %v147 = vld [vmem:[%s2 + $0x70] sm:$0xff]
  %v148 = vld [vmem:[%s2 + $0x78] sm:$0xff]
  %v149 = vld [vmem:[%s2 + $0x80] sm:$0xff]
  %v150 = vld [vmem:[%s2 + $0x88] sm:$0xff]
  %v151 = vld [vmem:[%s2 + $0x90] sm:$0xff]
  %v152 = vld [vmem:[%s2 + $0x98] sm:$0xff]
  %154 = vset.pattern.permute.xlu0 0
  %155 = vperm.xlu0 %154, %v133
  %v156 = vpop.permute.xlu0 %155
  %159 = vset.pattern.permute.xlu0 0
  %160 = vperm.xlu0 %159, %v134
  %v161 = vpop.permute.xlu0 %160
  %164 = vset.pattern.permute.xlu0 0
  %165 = vperm.xlu0 %164, %v135
  %v166 = vpop.permute.xlu0 %165
  %169 = vset.pattern.permute.xlu0 0
  %170 = vperm.xlu0 %169, %v136
  %v171 = vpop.permute.xlu0 %170
  %174 = vset.pattern.permute.xlu0 0
  %175 = vperm.xlu0 %174, %v137
  %v176 = vpop.permute.xlu0 %175
  %179 = vset.pattern.permute.xlu0 0
  %180 = vperm.xlu0 %179, %v138
  %v181 = vpop.permute.xlu0 %180
  %184 = vset.pattern.permute.xlu0 0
  %185 = vperm.xlu0 %184, %v139
  %v186 = vpop.permute.xlu0 %185
  %189 = vset.pattern.permute.xlu0 0
  %190 = vperm.xlu0 %189, %v140
  %v191 = vpop.permute.xlu0 %190
  %194 = vset.pattern.permute.xlu0 0
  %195 = vperm.xlu0 %194, %v141
  %v196 = vpop.permute.xlu0 %195
  %199 = vset.pattern.permute.xlu0 0
  %200 = vperm.xlu0 %199, %v142
  %v201 = vpop.permute.xlu0 %200
  %204 = vset.pattern.permute.xlu0 0
  %205 = vperm.xlu0 %204, %v143
  %v206 = vpop.permute.xlu0 %205
  %209 = vset.pattern.permute.xlu0 0
  %210 = vperm.xlu0 %209, %v144
  %v211 = vpop.permute.xlu0 %210
  %214 = vset.pattern.permute.xlu0 0
  %215 = vperm.xlu0 %214, %v145
  %v216 = vpop.permute.xlu0 %215
  %219 = vset.pattern.permute.xlu0 0
  %220 = vperm.xlu0 %219, %v146
  %v221 = vpop.permute.xlu0 %220
  %224 = vset.pattern.permute.xlu0 0
  %225 = vperm.xlu0 %224, %v147
  %v226 = vpop.permute.xlu0 %225
  %229 = vset.pattern.permute.xlu0 0
  %230 = vperm.xlu0 %229, %v148
  %v231 = vpop.permute.xlu0 %230
  %234 = vset.pattern.permute.xlu0 0
  %235 = vperm.xlu0 %234, %v149
  %v236 = vpop.permute.xlu0 %235
  %239 = vset.pattern.permute.xlu0 0
  %240 = vperm.xlu0 %239, %v150
  %v241 = vpop.permute.xlu0 %240
  %244 = vset.pattern.permute.xlu0 0
  %245 = vperm.xlu0 %244, %v151
  %v246 = vpop.permute.xlu0 %245
  %249 = vset.pattern.permute.xlu0 0
  %250 = vperm.xlu0 %249, %v152
  %v251 = vpop.permute.xlu0 %250
  %v293 = vunpack.c.l.b16 %v21
  %v294 = vunpack.c.h.b16 %v21
  %v295 = vunpack.c.l.b16 %v22
  %v296 = vunpack.c.l.b16 %v23
  %v297 = vunpack.c.h.b16 %v23
  %v298 = vunpack.c.l.b16 %v24
  %v299 = vunpack.c.l.b16 %v25
  %v300 = vunpack.c.h.b16 %v25
  %v301 = vunpack.c.l.b16 %v26
  %v302 = vunpack.c.l.b16 %v27
  %v303 = vunpack.c.h.b16 %v27
  %v304 = vunpack.c.l.b16 %v28
  %v305 = vunpack.c.l.b16 %v29
  %v306 = vunpack.c.h.b16 %v29
  %v307 = vunpack.c.l.b16 %v30
  %v308 = vunpack.c.l.b16 %v31
  %v309 = vunpack.c.h.b16 %v31
  %v310 = vunpack.c.l.b16 %v32
  %v311 = vunpack.c.l.b16 %v33
  %v312 = vunpack.c.h.b16 %v33
  %v313 = vunpack.c.l.b16 %v34
  %v314 = vunpack.c.l.b16 %v35
  %v315 = vunpack.c.h.b16 %v35
  %v316 = vunpack.c.l.b16 %v36
  %v317 = vunpack.c.l.b16 %v37
  %v318 = vunpack.c.h.b16 %v37
  %v319 = vunpack.c.l.b16 %v38
  %v320 = vunpack.c.l.b16 %v39
  %v321 = vunpack.c.h.b16 %v39
  %v322 = vunpack.c.l.b16 %v40
  %v323 = vunpack.c.l.b16 %v41
  %v324 = vunpack.c.h.b16 %v41
  %v325 = vunpack.c.l.b16 %v42
  %v326 = vunpack.c.l.b16 %v43
  %v327 = vunpack.c.h.b16 %v43
  %v328 = vunpack.c.l.b16 %v44
  %v329 = vunpack.c.l.b16 %v45
  %v330 = vunpack.c.h.b16 %v45
  %v331 = vunpack.c.l.b16 %v46
  %v332 = vunpack.c.l.b16 %v47
  %v333 = vunpack.c.h.b16 %v47
  %v334 = vunpack.c.l.b16 %v48
  %v335 = vunpack.c.l.b16 %v49
  %v336 = vunpack.c.h.b16 %v49
  %v337 = vunpack.c.l.b16 %v50
  %v338 = vunpack.c.l.b16 %v51
  %v339 = vunpack.c.h.b16 %v51
  %v340 = vunpack.c.l.b16 %v52
  %v341 = vunpack.c.l.b16 %v53
  %v342 = vunpack.c.h.b16 %v53
  %v343 = vunpack.c.l.b16 %v54
  %v344 = vunpack.c.l.b16 %v55
  %v345 = vunpack.c.h.b16 %v55
  %v346 = vunpack.c.l.b16 %v56
  %v347 = vunpack.c.l.b16 %v57
  %v348 = vunpack.c.h.b16 %v57
  %v349 = vunpack.c.l.b16 %v58
  %v350 = vunpack.c.l.b16 %v59
  %v351 = vunpack.c.h.b16 %v59
  %v352 = vunpack.c.l.b16 %v60
  %v353 = vpack.c.b16 %v296, %v293
  %v354 = vpack.c.b16 %v297, %v294
  %v355 = vpack.c.b16 %v298, %v295
  %v356 = vpack.c.b16 %v302, %v299
  %v357 = vpack.c.b16 %v303, %v300
  %v358 = vpack.c.b16 %v304, %v301
  %v359 = vpack.c.b16 %v308, %v305
  %v360 = vpack.c.b16 %v309, %v306
  %v361 = vpack.c.b16 %v310, %v307
  %v362 = vpack.c.b16 %v314, %v311
  %v363 = vpack.c.b16 %v315, %v312
  %v364 = vpack.c.b16 %v316, %v313
  %v365 = vpack.c.b16 %v320, %v317
  %v366 = vpack.c.b16 %v321, %v318
  %v367 = vpack.c.b16 %v322, %v319
  %v368 = vpack.c.b16 %v326, %v323
  %v369 = vpack.c.b16 %v327, %v324
  %v370 = vpack.c.b16 %v328, %v325
  %v371 = vpack.c.b16 %v332, %v329
  %v372 = vpack.c.b16 %v333, %v330
  %v373 = vpack.c.b16 %v334, %v331
  %v374 = vpack.c.b16 %v338, %v335
  %v375 = vpack.c.b16 %v339, %v336
  %v376 = vpack.c.b16 %v340, %v337
  %v377 = vpack.c.b16 %v344, %v341
  %v378 = vpack.c.b16 %v345, %v342
  %v379 = vpack.c.b16 %v346, %v343
  %v380 = vpack.c.b16 %v350, %v347
  %v381 = vpack.c.b16 %v351, %v348
  %v382 = vpack.c.b16 %v352, %v349
  %v475 = vunpack.c.l.b16 %v61
  %v476 = vunpack.c.h.b16 %v61
  %v477 = vunpack.c.l.b16 %v62
  %v478 = vunpack.c.h.b16 %v62
  %v479 = vunpack.c.l.b16 %v63
  %v480 = vunpack.c.h.b16 %v63
  %v481 = vunpack.c.l.b16 %v64
  %v482 = vunpack.c.h.b16 %v64
  %v483 = vunpack.c.l.b16 %v65
  %v484 = vunpack.c.h.b16 %v65
  %v485 = vunpack.c.l.b16 %v66
  %v486 = vunpack.c.h.b16 %v66
  %v487 = vunpack.c.l.b16 %v67
  %v488 = vunpack.c.h.b16 %v67
  %v489 = vunpack.c.l.b16 %v68
  %v490 = vunpack.c.h.b16 %v68
  %v491 = vunpack.c.l.b16 %v69
  %v492 = vunpack.c.h.b16 %v69
  %v493 = vunpack.c.l.b16 %v70
  %v494 = vunpack.c.h.b16 %v70
  %v495 = vunpack.c.l.b16 %v71
  %v496 = vunpack.c.h.b16 %v71
  %v497 = vunpack.c.l.b16 %v72
  %v498 = vunpack.c.h.b16 %v72
  %v499 = vunpack.c.l.b16 %v73
  %v500 = vunpack.c.h.b16 %v73
  %v501 = vunpack.c.l.b16 %v74
  %v502 = vunpack.c.h.b16 %v74
  %v503 = vunpack.c.l.b16 %v75
  %v504 = vunpack.c.h.b16 %v75
  %v505 = vunpack.c.l.b16 %v76
  %v506 = vunpack.c.h.b16 %v76
  %v507 = vunpack.c.l.b16 %v77
  %v508 = vunpack.c.h.b16 %v77
  %v509 = vunpack.c.l.b16 %v78
  %v510 = vunpack.c.h.b16 %v78
  %v511 = vunpack.c.l.b16 %v79
  %v512 = vunpack.c.h.b16 %v79
  %v513 = vunpack.c.l.b16 %v80
  %v514 = vunpack.c.h.b16 %v80
  %v515 = vunpack.c.l.b16 %v81
  %v516 = vunpack.c.h.b16 %v81
  %v517 = vunpack.c.l.b16 %v82
  %v518 = vunpack.c.h.b16 %v82
  %v519 = vunpack.c.l.b16 %v83
  %v520 = vunpack.c.h.b16 %v83
  %v521 = vunpack.c.l.b16 %v84
  %v522 = vunpack.c.h.b16 %v84
  %v523 = vunpack.c.l.b16 %v85
  %v524 = vunpack.c.h.b16 %v85
  %v525 = vunpack.c.l.b16 %v86
  %v526 = vunpack.c.h.b16 %v86
  %v527 = vunpack.c.l.b16 %v87
  %v528 = vunpack.c.h.b16 %v87
  %v529 = vunpack.c.l.b16 %v88
  %v530 = vunpack.c.h.b16 %v88
  %v531 = vunpack.c.l.b16 %v89
  %v532 = vunpack.c.h.b16 %v89
  %v533 = vunpack.c.l.b16 %v90
  %v534 = vunpack.c.h.b16 %v90
  %v535 = vunpack.c.l.b16 %v91
  %v536 = vunpack.c.h.b16 %v91
  %v537 = vunpack.c.l.b16 %v92
  %v538 = vunpack.c.h.b16 %v92
  %v539 = vunpack.c.l.b16 %v93
  %v540 = vunpack.c.h.b16 %v93
  %v541 = vunpack.c.l.b16 %v94
  %v542 = vunpack.c.h.b16 %v94
  %v543 = vunpack.c.l.b16 %v95
  %v544 = vunpack.c.h.b16 %v95
  %v545 = vunpack.c.l.b16 %v96
  %v546 = vunpack.c.h.b16 %v96
  %v547 = vunpack.c.l.b16 %v97
  %v548 = vunpack.c.h.b16 %v97
  %v549 = vunpack.c.l.b16 %v98
  %v550 = vunpack.c.h.b16 %v98
  %v551 = vunpack.c.l.b16 %v99
  %v552 = vunpack.c.h.b16 %v99
  %v553 = vunpack.c.l.b16 %v100
  %v554 = vunpack.c.h.b16 %v100
  %v555 = vunpack.c.l.b16 %v101
  %v556 = vunpack.c.h.b16 %v101
  %v557 = vunpack.c.l.b16 %v102
  %v558 = vunpack.c.h.b16 %v102
  %v559 = vunpack.c.l.b16 %v103
  %v560 = vunpack.c.h.b16 %v103
  %v561 = vunpack.c.l.b16 %v104
  %v562 = vunpack.c.h.b16 %v104
  %v563 = vunpack.c.l.b16 %v105
  %v564 = vunpack.c.h.b16 %v105
  %v565 = vunpack.c.l.b16 %v106
  %v566 = vunpack.c.h.b16 %v106
  %v567 = vunpack.c.l.b16 %v107
  %v568 = vunpack.c.h.b16 %v107
  %v569 = vunpack.c.l.b16 %v108
  %v570 = vunpack.c.h.b16 %v108
  %v571 = vunpack.c.l.b16 %v109
  %v572 = vunpack.c.h.b16 %v109
  %v573 = vunpack.c.l.b16 %v110
  %v574 = vunpack.c.h.b16 %v110
  %v575 = vunpack.c.l.b16 %v111
  %v576 = vunpack.c.h.b16 %v111
  %v577 = vunpack.c.l.b16 %v112
  %v578 = vunpack.c.h.b16 %v112
  %v579 = vunpack.c.l.b16 %v113
  %v580 = vunpack.c.h.b16 %v113
  %v581 = vunpack.c.l.b16 %v114
  %v582 = vunpack.c.h.b16 %v114
  %v583 = vunpack.c.l.b16 %v115
  %v584 = vunpack.c.h.b16 %v115
  %v585 = vunpack.c.l.b16 %v116
  %v586 = vunpack.c.h.b16 %v116
  %v587 = vunpack.c.l.b16 %v117
  %v588 = vunpack.c.h.b16 %v117
  %v589 = vunpack.c.l.b16 %v118
  %v590 = vunpack.c.h.b16 %v118
  %v591 = vunpack.c.l.b16 %v119
  %v592 = vunpack.c.h.b16 %v119
  %v593 = vunpack.c.l.b16 %v120
  %v594 = vunpack.c.h.b16 %v120
  %v595 = vunpack.c.l.b16 %v121
  %v596 = vunpack.c.h.b16 %v121
  %v597 = vunpack.c.l.b16 %v122
  %v598 = vunpack.c.h.b16 %v122
  %v599 = vunpack.c.l.b16 %v123
  %v600 = vunpack.c.h.b16 %v123
  %v601 = vunpack.c.l.b16 %v124
  %v602 = vunpack.c.h.b16 %v124
  %v603 = vunpack.c.l.b16 %v125
  %v604 = vunpack.c.h.b16 %v125
  %v605 = vunpack.c.l.b16 %v126
  %v606 = vunpack.c.h.b16 %v126
  %v607 = vunpack.c.l.b16 %v127
  %v608 = vunpack.c.h.b16 %v127
  %v609 = vunpack.c.l.b16 %v128
  %v610 = vunpack.c.h.b16 %v128
  %v611 = vunpack.c.l.b16 %v129
  %v612 = vunpack.c.h.b16 %v129
  %v613 = vunpack.c.l.b16 %v130
  %v614 = vunpack.c.h.b16 %v130
  %v615 = vunpack.c.l.b16 %v131
  %v616 = vunpack.c.h.b16 %v131
  %v617 = vunpack.c.l.b16 %v132
  %v618 = vunpack.c.h.b16 %v132
  %v619 = vpack.c.b16 %v479, %v475
  %v620 = vpack.c.b16 %v480, %v476
  %v621 = vpack.c.b16 %v481, %v477
  %v622 = vpack.c.b16 %v482, %v478
  %v623 = vpack.c.b16 %v487, %v483
  %v624 = vpack.c.b16 %v488, %v484
  %v625 = vpack.c.b16 %v489, %v485
  %v626 = vpack.c.b16 %v490, %v486
  %v627 = vpack.c.b16 %v495, %v491
  %v628 = vpack.c.b16 %v496, %v492
  %v629 = vpack.c.b16 %v497, %v493
  %v630 = vpack.c.b16 %v498, %v494
  %v631 = vpack.c.b16 %v503, %v499
  %v632 = vpack.c.b16 %v504, %v500
  %v633 = vpack.c.b16 %v505, %v501
  %v634 = vpack.c.b16 %v506, %v502
  %v635 = vpack.c.b16 %v511, %v507
  %v636 = vpack.c.b16 %v512, %v508
  %v637 = vpack.c.b16 %v513, %v509
  %v638 = vpack.c.b16 %v514, %v510
  %v639 = vpack.c.b16 %v519, %v515
  %v640 = vpack.c.b16 %v520, %v516
  %v641 = vpack.c.b16 %v521, %v517
  %v642 = vpack.c.b16 %v522, %v518
  %v643 = vpack.c.b16 %v527, %v523
  %v644 = vpack.c.b16 %v528, %v524
  %v645 = vpack.c.b16 %v529, %v525
  %v646 = vpack.c.b16 %v530, %v526
  %v647 = vpack.c.b16 %v535, %v531
  %v648 = vpack.c.b16 %v536, %v532
  %v649 = vpack.c.b16 %v537, %v533
  %v650 = vpack.c.b16 %v538, %v534
  %v651 = vpack.c.b16 %v543, %v539
  %v652 = vpack.c.b16 %v544, %v540
  %v653 = vpack.c.b16 %v545, %v541
  %v654 = vpack.c.b16 %v546, %v542
  %v655 = vpack.c.b16 %v551, %v547
  %v656 = vpack.c.b16 %v552, %v548
  %v657 = vpack.c.b16 %v553, %v549
  %v658 = vpack.c.b16 %v554, %v550
  %v659 = vpack.c.b16 %v559, %v555
  %v660 = vpack.c.b16 %v560, %v556
  %v661 = vpack.c.b16 %v561, %v557
  %v662 = vpack.c.b16 %v562, %v558
  %v663 = vpack.c.b16 %v567, %v563
  %v664 = vpack.c.b16 %v568, %v564
  %v665 = vpack.c.b16 %v569, %v565
  %v666 = vpack.c.b16 %v570, %v566
  %v667 = vpack.c.b16 %v575, %v571
  %v668 = vpack.c.b16 %v576, %v572
  %v669 = vpack.c.b16 %v577, %v573
  %v670 = vpack.c.b16 %v578, %v574
  %v671 = vpack.c.b16 %v583, %v579
  %v672 = vpack.c.b16 %v584, %v580
  %v673 = vpack.c.b16 %v585, %v581
  %v674 = vpack.c.b16 %v586, %v582
  %v675 = vpack.c.b16 %v591, %v587
  %v676 = vpack.c.b16 %v592, %v588
  %v677 = vpack.c.b16 %v593, %v589
  %v678 = vpack.c.b16 %v594, %v590
  %v679 = vpack.c.b16 %v599, %v595
  %v680 = vpack.c.b16 %v600, %v596
  %v681 = vpack.c.b16 %v601, %v597
  %v682 = vpack.c.b16 %v602, %v598
  %v683 = vpack.c.b16 %v607, %v603
  %v684 = vpack.c.b16 %v608, %v604
  %v685 = vpack.c.b16 %v609, %v605
  %v686 = vpack.c.b16 %v610, %v606
  %v687 = vpack.c.b16 %v615, %v611
  %v688 = vpack.c.b16 %v616, %v612
  %v689 = vpack.c.b16 %v617, %v613
  %v690 = vpack.c.b16 %v618, %v614
  %vm763 = vcmask 261120
  %v765 = vsel %vm763, %v355, 0
  %v768 = vsel %vm763, %v358, 0
  %v771 = vsel %vm763, %v361, 0
  %v774 = vsel %vm763, %v364, 0
  %v777 = vsel %vm763, %v367, 0
  %v780 = vsel %vm763, %v370, 0
  %v783 = vsel %vm763, %v373, 0
  %v786 = vsel %vm763, %v376, 0
  %v789 = vsel %vm763, %v379, 0
  %v792 = vsel %vm763, %v382, 0
  %794 = vmatprep.subr.bf16.mxu0 %v620
  %795 = vmatpush1.bf16.msra.mxu0 %v619
  %796 = vmatprep.subr.bf16.mxu0 %v624
  %797 = vmatpush1.bf16.msra.mxu0 %v623
  %798 = vmatprep.subr.bf16.mxu0 %v628
  %799 = vmatpush1.bf16.msra.mxu0 %v627
  %800 = vmatprep.subr.bf16.mxu0 %v632
  %801 = vmatpush1.bf16.msra.mxu0 %v631
  %802 = vmatprep.subr.bf16.mxu0 %v636
  %803 = vmatpush1.bf16.msra.mxu0 %v635
  %804 = vmatprep.subr.bf16.mxu0 %v640
  %805 = vmatpush1.bf16.msra.mxu0 %v639
  %806 = vmatprep.subr.bf16.mxu0 %v644
  %807 = vmatpush1.bf16.msra.mxu0 %v643
  %808 = vmatprep.subr.bf16.mxu0 %v648
  %809 = vmatpush1.bf16.msra.mxu0 %v647
  %810 = vmatprep.subr.bf16.mxu0 %v652
  %811 = vmatpush1.bf16.msra.mxu0 %v651
  %812 = vmatprep.subr.bf16.mxu0 %v656
  %813 = vmatpush1.bf16.msra.mxu0 %v655
  %814 = vmatprep.subr.bf16.mxu0 %v660
  %815 = vmatpush1.bf16.msra.mxu0 %v659
  %816 = vmatprep.subr.bf16.mxu0 %v664
  %817 = vmatpush1.bf16.msra.mxu0 %v663
  %818 = vmatprep.subr.bf16.mxu0 %v668
  %819 = vmatpush1.bf16.msra.mxu0 %v667
  %820 = vmatprep.subr.bf16.mxu0 %v672
  %821 = vmatpush1.bf16.msra.mxu0 %v671
  %822 = vmatprep.subr.bf16.mxu0 %v676
  %823 = vmatpush1.bf16.msra.mxu0 %v675
  %824 = vmatprep.subr.bf16.mxu0 %v680
  %825 = vmatpush1.bf16.msra.mxu0 %v679
  %826 = vmatprep.mubr.bf16.mxu0 %v354
  %827 = vmatmul.mubr.bf16.gmra.mrb[0].mxu0 %v353
  %v828 = vpop.f32.mrb[0].mxu0
  %v829 = vadd.f32 %v156, %v828
  %v830 = vpop.f32.mrb[0].mxu0
  %v831 = vadd.f32 %v156, %v830
  %v832 = vpop.f32.mrb[0].mxu0
  %v833 = vadd.f32 %v161, %v832
  %v834 = vpop.f32.mrb[0].mxu0
  %v835 = vadd.f32 %v161, %v834
  %836 = vmatprep.mubr.bf16.mxu0 %v357
  %837 = vmatmul.mubr.bf16.gmra.mrb[0].mxu0 %v356
  %v838 = vpop.f32.mrb[0].mxu0
  %v839 = vadd.f32 %v166, %v838
  %v840 = vpop.f32.mrb[0].mxu0
  %v841 = vadd.f32 %v166, %v840
  %v842 = vpop.f32.mrb[0].mxu0
  %v843 = vadd.f32 %v171, %v842
  %v844 = vpop.f32.mrb[0].mxu0
  %v845 = vadd.f32 %v171, %v844
  %846 = vmatprep.mubr.bf16.mxu0 %v360
  %847 = vmatmul.mubr.bf16.gmra.mrb[0].mxu0 %v359
  %v848 = vpop.f32.mrb[0].mxu0
  %v849 = vadd.f32 %v176, %v848
  %v850 = vpop.f32.mrb[0].mxu0
  %v851 = vadd.f32 %v176, %v850
  %v852 = vpop.f32.mrb[0].mxu0
  %v853 = vadd.f32 %v181, %v852
  %v854 = vpop.f32.mrb[0].mxu0
  %v855 = vadd.f32 %v181, %v854
  %856 = vmatprep.mubr.bf16.mxu0 %v363
  %857 = vmatmul.mubr.bf16.gmra.mrb[0].mxu0 %v362
  %v858 = vpop.f32.mrb[0].mxu0
  %v859 = vadd.f32 %v186, %v858
  %v860 = vpop.f32.mrb[0].mxu0
  %v861 = vadd.f32 %v186, %v860
  %v862 = vpop.f32.mrb[0].mxu0
  %v863 = vadd.f32 %v191, %v862
  %v864 = vpop.f32.mrb[0].mxu0
  %v865 = vadd.f32 %v191, %v864
  %866 = vmatprep.mubr.bf16.mxu0 %v366
  %867 = vmatmul.mubr.bf16.gmra.mrb[0].mxu0 %v365
  %v868 = vpop.f32.mrb[0].mxu0
  %v869 = vadd.f32 %v196, %v868
  %v870 = vpop.f32.mrb[0].mxu0
  %v871 = vadd.f32 %v196, %v870
  %v872 = vpop.f32.mrb[0].mxu0
  %v873 = vadd.f32 %v201, %v872
  %v874 = vpop.f32.mrb[0].mxu0
  %v875 = vadd.f32 %v201, %v874
  %876 = vmatprep.mubr.bf16.mxu0 %v369
  %877 = vmatmul.mubr.bf16.gmra.mrb[0].mxu0 %v368
  %v878 = vpop.f32.mrb[0].mxu0
  %v879 = vadd.f32 %v206, %v878
  %v880 = vpop.f32.mrb[0].mxu0
  %v881 = vadd.f32 %v206, %v880
  %v882 = vpop.f32.mrb[0].mxu0
  %v883 = vadd.f32 %v211, %v882
  %v884 = vpop.f32.mrb[0].mxu0
  %v885 = vadd.f32 %v211, %v884
  %886 = vmatprep.mubr.bf16.mxu0 %v372
  %887 = vmatmul.mubr.bf16.gmra.mrb[0].mxu0 %v371
  %v888 = vpop.f32.mrb[0].mxu0
  %v889 = vadd.f32 %v216, %v888
  %v890 = vpop.f32.mrb[0].mxu0
  %v891 = vadd.f32 %v216, %v890
  %v892 = vpop.f32.mrb[0].mxu0
  %v893 = vadd.f32 %v221, %v892
  %v894 = vpop.f32.mrb[0].mxu0
  %v895 = vadd.f32 %v221, %v894
  %896 = vmatprep.mubr.bf16.mxu0 %v375
  %897 = vmatmul.mubr.bf16.gmra.mrb[0].mxu0 %v374
  %v898 = vpop.f32.mrb[0].mxu0
  %v899 = vadd.f32 %v226, %v898
  %v900 = vpop.f32.mrb[0].mxu0
  %v901 = vadd.f32 %v226, %v900
  %v902 = vpop.f32.mrb[0].mxu0
  %v903 = vadd.f32 %v231, %v902
  %v904 = vpop.f32.mrb[0].mxu0
  %v905 = vadd.f32 %v231, %v904
  %906 = vmatprep.mubr.bf16.mxu0 %v378
  %907 = vmatmul.mubr.bf16.gmra.mrb[0].mxu0 %v377
  %v908 = vpop.f32.mrb[0].mxu0
  %v909 = vadd.f32 %v236, %v908
  %v910 = vpop.f32.mrb[0].mxu0
  %v911 = vadd.f32 %v236, %v910
  %v912 = vpop.f32.mrb[0].mxu0
  %v913 = vadd.f32 %v241, %v912
  %v914 = vpop.f32.mrb[0].mxu0
  %v915 = vadd.f32 %v241, %v914
  %916 = vmatprep.mubr.bf16.mxu0 %v381
  %917 = vmatmul.mubr.bf16.gmra.mrb[0].mxu0 %v380
  %v918 = vpop.f32.mrb[0].mxu0
  %v919 = vadd.f32 %v246, %v918
  %v920 = vpop.f32.mrb[0].mxu0
  %v921 = vadd.f32 %v246, %v920
  %v922 = vpop.f32.mrb[0].mxu0
  %v923 = vadd.f32 %v251, %v922
  %v924 = vpop.f32.mrb[0].mxu0
  %v925 = vadd.f32 %v251, %v924
  %926 = vdwg.mxu0
  %927 = vmatprep.subr.bf16.mxu0 %v684
  %928 = vmatpush1.bf16.msra.mxu0 %v683
  %929 = vmatprep.subr.bf16.mxu0 %v688
  %930 = vmatpush1.bf16.msra.mxu0 %v687
  %931 = vmatprep.subr.bf16.mxu0 0
  %932 = vmatpush1.bf16.msra.mxu0 0
  %933 = vmatprep.subr.bf16.mxu0 0
  %934 = vmatpush1.bf16.msra.mxu0 0
  %935 = vmatprep.subr.bf16.mxu0 0
  %936 = vmatpush1.bf16.msra.mxu0 0
  %937 = vmatprep.subr.bf16.mxu0 0
  %938 = vmatpush1.bf16.msra.mxu0 0
  %939 = vmatprep.subr.bf16.mxu0 0
  %940 = vmatpush1.bf16.msra.mxu0 0
  %941 = vmatprep.subr.bf16.mxu0 0
  %942 = vmatpush1.bf16.msra.mxu0 0
  %943 = vmatprep.subr.bf16.mxu0 0
  %944 = vmatpush1.bf16.msra.mxu0 0
  %945 = vmatprep.subr.bf16.mxu0 0
  %946 = vmatpush1.bf16.msra.mxu0 0
  %947 = vmatprep.subr.bf16.mxu0 0
  %948 = vmatpush1.bf16.msra.mxu0 0
  %949 = vmatprep.subr.bf16.mxu0 0
  %950 = vmatpush1.bf16.msra.mxu0 0
  %951 = vmatprep.subr.bf16.mxu0 0
  %952 = vmatpush1.bf16.msra.mxu0 0
  %953 = vmatprep.subr.bf16.mxu0 0
  %954 = vmatpush1.bf16.msra.mxu0 0
  %955 = vmatprep.subr.bf16.mxu0 0
  %956 = vmatpush1.bf16.msra.mxu0 0
  %957 = vmatprep.subr.bf16.mxu0 0
  %958 = vmatpush1.bf16.msra.mxu0 0
  %959 = vmatprep.mubr.bf16.mxu0 0
  %960 = vmatmul.mubr.bf16.gmra.mrb[0].mxu0 %v765
  %v961 = vpop.f32.mrb[0].mxu0
  %v962 = vadd.f32 %v829, %v961
  %v963 = vpop.f32.mrb[0].mxu0
  %v964 = vadd.f32 %v831, %v963
  %v965 = vpop.f32.mrb[0].mxu0
  %v966 = vadd.f32 %v833, %v965
  %v967 = vpop.f32.mrb[0].mxu0
  %v968 = vadd.f32 %v835, %v967
  %969 = vmatprep.mubr.bf16.mxu0 0
  %970 = vmatmul.mubr.bf16.gmra.mrb[0].mxu0 %v768
  %v971 = vpop.f32.mrb[0].mxu0
  %v972 = vadd.f32 %v839, %v971
  %v973 = vpop.f32.mrb[0].mxu0
  %v974 = vadd.f32 %v841, %v973
  %v975 = vpop.f32.mrb[0].mxu0
  %v976 = vadd.f32 %v843, %v975
  %v977 = vpop.f32.mrb[0].mxu0
  %v978 = vadd.f32 %v845, %v977
  %979 = vmatprep.mubr.bf16.mxu0 0
  %980 = vmatmul.mubr.bf16.gmra.mrb[0].mxu0 %v771
  %v981 = vpop.f32.mrb[0].mxu0
  %v982 = vadd.f32 %v849, %v981
  %v983 = vpop.f32.mrb[0].mxu0
  %v984 = vadd.f32 %v851, %v983
  %v985 = vpop.f32.mrb[0].mxu0
  %v986 = vadd.f32 %v853, %v985
  %v987 = vpop.f32.mrb[0].mxu0
  %v988 = vadd.f32 %v855, %v987
  %989 = vmatprep.mubr.bf16.mxu0 0
  %990 = vmatmul.mubr.bf16.gmra.mrb[0].mxu0 %v774
  %v991 = vpop.f32.mrb[0].mxu0
  %v992 = vadd.f32 %v859, %v991
  %v993 = vpop.f32.mrb[0].mxu0
  %v994 = vadd.f32 %v861, %v993
  %v995 = vpop.f32.mrb[0].mxu0
  %v996 = vadd.f32 %v863, %v995
  %v997 = vpop.f32.mrb[0].mxu0
  %v998 = vadd.f32 %v865, %v997
  %999 = vmatprep.mubr.bf16.mxu0 0
  %1000 = vmatmul.mubr.bf16.gmra.mrb[0].mxu0 %v777
  %v1001 = vpop.f32.mrb[0].mxu0
  %v1002 = vadd.f32 %v869, %v1001
  %v1003 = vpop.f32.mrb[0].mxu0
  %v1004 = vadd.f32 %v871, %v1003
  %v1005 = vpop.f32.mrb[0].mxu0
  %v1006 = vadd.f32 %v873, %v1005
  %v1007 = vpop.f32.mrb[0].mxu0
  %v1008 = vadd.f32 %v875, %v1007
  %1009 = vmatprep.mubr.bf16.mxu0 0
  %1010 = vmatmul.mubr.bf16.gmra.mrb[0].mxu0 %v780
  %v1011 = vpop.f32.mrb[0].mxu0
  %v1012 = vadd.f32 %v879, %v1011
  %v1013 = vpop.f32.mrb[0].mxu0
  %v1014 = vadd.f32 %v881, %v1013
  %v1015 = vpop.f32.mrb[0].mxu0
  %v1016 = vadd.f32 %v883, %v1015
  %v1017 = vpop.f32.mrb[0].mxu0
  %v1018 = vadd.f32 %v885, %v1017
  %1019 = vmatprep.mubr.bf16.mxu0 0
  %1020 = vmatmul.mubr.bf16.gmra.mrb[0].mxu0 %v783
  %v1021 = vpop.f32.mrb[0].mxu0
  %v1022 = vadd.f32 %v889, %v1021
  %v1023 = vpop.f32.mrb[0].mxu0
  %v1024 = vadd.f32 %v891, %v1023
  %v1025 = vpop.f32.mrb[0].mxu0
  %v1026 = vadd.f32 %v893, %v1025
  %v1027 = vpop.f32.mrb[0].mxu0
  %v1028 = vadd.f32 %v895, %v1027
  %1029 = vmatprep.mubr.bf16.mxu0 0
  %1030 = vmatmul.mubr.bf16.gmra.mrb[0].mxu0 %v786
  %v1031 = vpop.f32.mrb[0].mxu0
  %v1032 = vadd.f32 %v899, %v1031
  %v1033 = vpop.f32.mrb[0].mxu0
  %v1034 = vadd.f32 %v901, %v1033
  %v1035 = vpop.f32.mrb[0].mxu0
  %v1036 = vadd.f32 %v903, %v1035
  %v1037 = vpop.f32.mrb[0].mxu0
  %v1038 = vadd.f32 %v905, %v1037
  %1039 = vmatprep.mubr.bf16.mxu0 0
  %1040 = vmatmul.mubr.bf16.gmra.mrb[0].mxu0 %v789
  %v1041 = vpop.f32.mrb[0].mxu0
  %v1042 = vadd.f32 %v909, %v1041
  %v1043 = vpop.f32.mrb[0].mxu0
  %v1044 = vadd.f32 %v911, %v1043
  %v1045 = vpop.f32.mrb[0].mxu0
  %v1046 = vadd.f32 %v913, %v1045
  %v1047 = vpop.f32.mrb[0].mxu0
  %v1048 = vadd.f32 %v915, %v1047
  %1049 = vmatprep.mubr.bf16.mxu0 0
  %1050 = vmatmul.mubr.bf16.gmra.mrb[0].mxu0 %v792
  %v1051 = vpop.f32.mrb[0].mxu0
  %v1052 = vadd.f32 %v919, %v1051
  %v1053 = vpop.f32.mrb[0].mxu0
  %v1054 = vadd.f32 %v921, %v1053
  %v1055 = vpop.f32.mrb[0].mxu0
  %v1056 = vadd.f32 %v923, %v1055
  %v1057 = vpop.f32.mrb[0].mxu0
  %v1058 = vadd.f32 %v925, %v1057
  %1059 = vdwg.mxu0
  %1060 = vmatprep.subr.bf16.mxu0 %v622
  %1061 = vmatpush1.bf16.msra.mxu0 %v621
  %1062 = vmatprep.subr.bf16.mxu0 %v626
  %1063 = vmatpush1.bf16.msra.mxu0 %v625
  %1064 = vmatprep.subr.bf16.mxu0 %v630
  %1065 = vmatpush1.bf16.msra.mxu0 %v629
  %1066 = vmatprep.subr.bf16.mxu0 %v634
  %1067 = vmatpush1.bf16.msra.mxu0 %v633
  %1068 = vmatprep.subr.bf16.mxu0 %v638
  %1069 = vmatpush1.bf16.msra.mxu0 %v637
  %1070 = vmatprep.subr.bf16.mxu0 %v642
  %1071 = vmatpush1.bf16.msra.mxu0 %v641
  %1072 = vmatprep.subr.bf16.mxu0 %v646
  %1073 = vmatpush1.bf16.msra.mxu0 %v645
  %1074 = vmatprep.subr.bf16.mxu0 %v650
  %1075 = vmatpush1.bf16.msra.mxu0 %v649
  %1076 = vmatprep.subr.bf16.mxu0 %v654
  %1077 = vmatpush1.bf16.msra.mxu0 %v653
  %1078 = vmatprep.subr.bf16.mxu0 %v658
  %1079 = vmatpush1.bf16.msra.mxu0 %v657
  %1080 = vmatprep.subr.bf16.mxu0 %v662
  %1081 = vmatpush1.bf16.msra.mxu0 %v661
  %1082 = vmatprep.subr.bf16.mxu0 %v666
  %1083 = vmatpush1.bf16.msra.mxu0 %v665
  %1084 = vmatprep.subr.bf16.mxu0 %v670
  %1085 = vmatpush1.bf16.msra.mxu0 %v669
  %1086 = vmatprep.subr.bf16.mxu0 %v674
  %1087 = vmatpush1.bf16.msra.mxu0 %v673
  %1088 = vmatprep.subr.bf16.mxu0 %v678
  %1089 = vmatpush1.bf16.msra.mxu0 %v677
  %1090 = vmatprep.subr.bf16.mxu0 %v682
  %1091 = vmatpush1.bf16.msra.mxu0 %v681
  %1092 = vmatprep.mubr.bf16.mxu0 %v354
  %1093 = vmatmul.mubr.bf16.gmra.mrb[0].mxu0 %v353
  %v1094 = vpop.f32.mrb[0].mxu0
  %v1095 = vadd.f32 %v156, %v1094
  %v1096 = vpop.f32.mrb[0].mxu0
  %v1097 = vadd.f32 %v156, %v1096
  %v1098 = vpop.f32.mrb[0].mxu0
  %v1099 = vadd.f32 %v161, %v1098
  %v1100 = vpop.f32.mrb[0].mxu0
  %v1101 = vadd.f32 %v161, %v1100
  %1102 = vmatprep.mubr.bf16.mxu0 %v357
  %1103 = vmatmul.mubr.bf16.gmra.mrb[0].mxu0 %v356
  %v1104 = vpop.f32.mrb[0].mxu0
  %v1105 = vadd.f32 %v166, %v1104
  %v1106 = vpop.f32.mrb[0].mxu0
  %v1107 = vadd.f32 %v166, %v1106
  %v1108 = vpop.f32.mrb[0].mxu0
  %v1109 = vadd.f32 %v171, %v1108
  %v1110 = vpop.f32.mrb[0].mxu0
  %v1111 = vadd.f32 %v171, %v1110
  %1112 = vmatprep.mubr.bf16.mxu0 %v360
  %1113 = vmatmul.mubr.bf16.gmra.mrb[0].mxu0 %v359
  %v1114 = vpop.f32.mrb[0].mxu0
  %v1115 = vadd.f32 %v176, %v1114
  %v1116 = vpop.f32.mrb[0].mxu0
  %v1117 = vadd.f32 %v176, %v1116
  %v1118 = vpop.f32.mrb[0].mxu0
  %v1119 = vadd.f32 %v181, %v1118
  %v1120 = vpop.f32.mrb[0].mxu0
  %v1121 = vadd.f32 %v181, %v1120
  %1122 = vmatprep.mubr.bf16.mxu0 %v363
  %1123 = vmatmul.mubr.bf16.gmra.mrb[0].mxu0 %v362
  %v1124 = vpop.f32.mrb[0].mxu0
  %v1125 = vadd.f32 %v186, %v1124
  %v1126 = vpop.f32.mrb[0].mxu0
  %v1127 = vadd.f32 %v186, %v1126
  %v1128 = vpop.f32.mrb[0].mxu0
  %v1129 = vadd.f32 %v191, %v1128
  %v1130 = vpop.f32.mrb[0].mxu0
  %v1131 = vadd.f32 %v191, %v1130
  %1132 = vmatprep.mubr.bf16.mxu0 %v366
  %1133 = vmatmul.mubr.bf16.gmra.mrb[0].mxu0 %v365
  %v1134 = vpop.f32.mrb[0].mxu0
  %v1135 = vadd.f32 %v196, %v1134
  %v1136 = vpop.f32.mrb[0].mxu0
  %v1137 = vadd.f32 %v196, %v1136
  %v1138 = vpop.f32.mrb[0].mxu0
  %v1139 = vadd.f32 %v201, %v1138
  %v1140 = vpop.f32.mrb[0].mxu0
  %v1141 = vadd.f32 %v201, %v1140
  %1142 = vmatprep.mubr.bf16.mxu0 %v369
  %1143 = vmatmul.mubr.bf16.gmra.mrb[0].mxu0 %v368
  %v1144 = vpop.f32.mrb[0].mxu0
  %v1145 = vadd.f32 %v206, %v1144
  %v1146 = vpop.f32.mrb[0].mxu0
  %v1147 = vadd.f32 %v206, %v1146
  %v1148 = vpop.f32.mrb[0].mxu0
  %v1149 = vadd.f32 %v211, %v1148
  %v1150 = vpop.f32.mrb[0].mxu0
  %v1151 = vadd.f32 %v211, %v1150
  %1152 = vmatprep.mubr.bf16.mxu0 %v372
  %1153 = vmatmul.mubr.bf16.gmra.mrb[0].mxu0 %v371
  %v1154 = vpop.f32.mrb[0].mxu0
  %v1155 = vadd.f32 %v216, %v1154
  %v1156 = vpop.f32.mrb[0].mxu0
  %v1157 = vadd.f32 %v216, %v1156
  %v1158 = vpop.f32.mrb[0].mxu0
  %v1159 = vadd.f32 %v221, %v1158
  %v1160 = vpop.f32.mrb[0].mxu0
  %v1161 = vadd.f32 %v221, %v1160
  %1162 = vmatprep.mubr.bf16.mxu0 %v375
  %1163 = vmatmul.mubr.bf16.gmra.mrb[0].mxu0 %v374
  %v1164 = vpop.f32.mrb[0].mxu0
  %v1165 = vadd.f32 %v226, %v1164
  %v1166 = vpop.f32.mrb[0].mxu0
  %v1167 = vadd.f32 %v226, %v1166
  %v1168 = vpop.f32.mrb[0].mxu0
  %v1169 = vadd.f32 %v231, %v1168
  %v1170 = vpop.f32.mrb[0].mxu0
  %v1171 = vadd.f32 %v231, %v1170
  %1172 = vmatprep.mubr.bf16.mxu0 %v378
  %1173 = vmatmul.mubr.bf16.gmra.mrb[0].mxu0 %v377
  %v1174 = vpop.f32.mrb[0].mxu0
  %v1175 = vadd.f32 %v236, %v1174
  %v1176 = vpop.f32.mrb[0].mxu0
  %v1177 = vadd.f32 %v236, %v1176
  %v1178 = vpop.f32.mrb[0].mxu0
  %v1179 = vadd.f32 %v241, %v1178
  %v1180 = vpop.f32.mrb[0].mxu0
  %v1181 = vadd.f32 %v241, %v1180
  %1182 = vmatprep.mubr.bf16.mxu0 %v381
  %1183 = vmatmul.mubr.bf16.gmra.mrb[0].mxu0 %v380
  %v1184 = vpop.f32.mrb[0].mxu0
  %v1185 = vadd.f32 %v246, %v1184
  %v1186 = vpop.f32.mrb[0].mxu0
  %v1187 = vadd.f32 %v246, %v1186
  %v1188 = vpop.f32.mrb[0].mxu0
  %v1189 = vadd.f32 %v251, %v1188
  %v1190 = vpop.f32.mrb[0].mxu0
  %v1191 = vadd.f32 %v251, %v1190
  %1192 = vdwg.mxu0
  %1193 = vmatprep.subr.bf16.mxu0 %v686
  %1194 = vmatpush1.bf16.msra.mxu0 %v685
  %1195 = vmatprep.subr.bf16.mxu0 %v690
  %1196 = vmatpush1.bf16.msra.mxu0 %v689
  %1197 = vmatprep.subr.bf16.mxu0 0
  %1198 = vmatpush1.bf16.msra.mxu0 0
  %1199 = vmatprep.subr.bf16.mxu0 0
  %1200 = vmatpush1.bf16.msra.mxu0 0
  %1201 = vmatprep.subr.bf16.mxu0 0
  %1202 = vmatpush1.bf16.msra.mxu0 0
  %1203 = vmatprep.subr.bf16.mxu0 0
  %1204 = vmatpush1.bf16.msra.mxu0 0
  %1205 = vmatprep.subr.bf16.mxu0 0
  %1206 = vmatpush1.bf16.msra.mxu0 0
  %1207 = vmatprep.subr.bf16.mxu0 0
  %1208 = vmatpush1.bf16.msra.mxu0 0
  %1209 = vmatprep.subr.bf16.mxu0 0
  %1210 = vmatpush1.bf16.msra.mxu0 0
  %1211 = vmatprep.subr.bf16.mxu0 0
  %1212 = vmatpush1.bf16.msra.mxu0 0
  %1213 = vmatprep.subr.bf16.mxu0 0
  %1214 = vmatpush1.bf16.msra.mxu0 0
  %1215 = vmatprep.subr.bf16.mxu0 0
  %1216 = vmatpush1.bf16.msra.mxu0 0
  %1217 = vmatprep.subr.bf16.mxu0 0
  %1218 = vmatpush1.bf16.msra.mxu0 0
  %1219 = vmatprep.subr.bf16.mxu0 0
  %1220 = vmatpush1.bf16.msra.mxu0 0
  %1221 = vmatprep.subr.bf16.mxu0 0
  %1222 = vmatpush1.bf16.msra.mxu0 0
  %1223 = vmatprep.subr.bf16.mxu0 0
  %1224 = vmatpush1.bf16.msra.mxu0 0
  %1225 = vmatprep.mubr.bf16.mxu0 0
  %1226 = vmatmul.mubr.bf16.gmra.mrb[0].mxu0 %v765
  %v1227 = vpop.f32.mrb[0].mxu0
  %v1228 = vadd.f32 %v1095, %v1227
  %v1229 = vpop.f32.mrb[0].mxu0
  %v1230 = vadd.f32 %v1097, %v1229
  %v1231 = vpop.f32.mrb[0].mxu0
  %v1232 = vadd.f32 %v1099, %v1231
  %v1233 = vpop.f32.mrb[0].mxu0
  %v1234 = vadd.f32 %v1101, %v1233
  %1235 = vmatprep.mubr.bf16.mxu0 0
  %1236 = vmatmul.mubr.bf16.gmra.mrb[0].mxu0 %v768
  %v1237 = vpop.f32.mrb[0].mxu0
  %v1238 = vadd.f32 %v1105, %v1237
  %v1239 = vpop.f32.mrb[0].mxu0
  %v1240 = vadd.f32 %v1107, %v1239
  %v1241 = vpop.f32.mrb[0].mxu0
  %v1242 = vadd.f32 %v1109, %v1241
  %v1243 = vpop.f32.mrb[0].mxu0
  %v1244 = vadd.f32 %v1111, %v1243
  %1245 = vmatprep.mubr.bf16.mxu0 0
  %1246 = vmatmul.mubr.bf16.gmra.mrb[0].mxu0 %v771
  %v1247 = vpop.f32.mrb[0].mxu0
  %v1248 = vadd.f32 %v1115, %v1247
  %v1249 = vpop.f32.mrb[0].mxu0
  %v1250 = vadd.f32 %v1117, %v1249
  %v1251 = vpop.f32.mrb[0].mxu0
  %v1252 = vadd.f32 %v1119, %v1251
  %v1253 = vpop.f32.mrb[0].mxu0
  %v1254 = vadd.f32 %v1121, %v1253
  %1255 = vmatprep.mubr.bf16.mxu0 0
  %1256 = vmatmul.mubr.bf16.gmra.mrb[0].mxu0 %v774
  %v1257 = vpop.f32.mrb[0].mxu0
  %v1258 = vadd.f32 %v1125, %v1257
  %v1259 = vpop.f32.mrb[0].mxu0
  %v1260 = vadd.f32 %v1127, %v1259
  %v1261 = vpop.f32.mrb[0].mxu0
  %v1262 = vadd.f32 %v1129, %v1261
  %v1263 = vpop.f32.mrb[0].mxu0
  %v1264 = vadd.f32 %v1131, %v1263
  %1265 = vmatprep.mubr.bf16.mxu0 0
  %1266 = vmatmul.mubr.bf16.gmra.mrb[0].mxu0 %v777
  %v1267 = vpop.f32.mrb[0].mxu0
  %v1268 = vadd.f32 %v1135, %v1267
  %v1269 = vpop.f32.mrb[0].mxu0
  %v1270 = vadd.f32 %v1137, %v1269
  %v1271 = vpop.f32.mrb[0].mxu0
  %v1272 = vadd.f32 %v1139, %v1271
  %v1273 = vpop.f32.mrb[0].mxu0
  %v1274 = vadd.f32 %v1141, %v1273
  %1275 = vmatprep.mubr.bf16.mxu0 0
  %1276 = vmatmul.mubr.bf16.gmra.mrb[0].mxu0 %v780
  %v1277 = vpop.f32.mrb[0].mxu0
  %v1278 = vadd.f32 %v1145, %v1277
  %v1279 = vpop.f32.mrb[0].mxu0
  %v1280 = vadd.f32 %v1147, %v1279
  %v1281 = vpop.f32.mrb[0].mxu0
  %v1282 = vadd.f32 %v1149, %v1281
  %v1283 = vpop.f32.mrb[0].mxu0
  %v1284 = vadd.f32 %v1151, %v1283
  %1285 = vmatprep.mubr.bf16.mxu0 0
  %1286 = vmatmul.mubr.bf16.gmra.mrb[0].mxu0 %v783
  %v1287 = vpop.f32.mrb[0].mxu0
  %v1288 = vadd.f32 %v1155, %v1287
  %v1289 = vpop.f32.mrb[0].mxu0
  %v1290 = vadd.f32 %v1157, %v1289
  %v1291 = vpop.f32.mrb[0].mxu0
  %v1292 = vadd.f32 %v1159, %v1291
  %v1293 = vpop.f32.mrb[0].mxu0
  %v1294 = vadd.f32 %v1161, %v1293
  %1295 = vmatprep.mubr.bf16.mxu0 0
  %1296 = vmatmul.mubr.bf16.gmra.mrb[0].mxu0 %v786
  %v1297 = vpop.f32.mrb[0].mxu0
  %v1298 = vadd.f32 %v1165, %v1297
  %v1299 = vpop.f32.mrb[0].mxu0
  %v1300 = vadd.f32 %v1167, %v1299
  %v1301 = vpop.f32.mrb[0].mxu0
  %v1302 = vadd.f32 %v1169, %v1301
  %v1303 = vpop.f32.mrb[0].mxu0
  %v1304 = vadd.f32 %v1171, %v1303
  %1305 = vmatprep.mubr.bf16.mxu0 0
  %1306 = vmatmul.mubr.bf16.gmra.mrb[0].mxu0 %v789
  %v1307 = vpop.f32.mrb[0].mxu0
  %v1308 = vadd.f32 %v1175, %v1307
  %v1309 = vpop.f32.mrb[0].mxu0
  %v1310 = vadd.f32 %v1177, %v1309
  %v1311 = vpop.f32.mrb[0].mxu0
  %v1312 = vadd.f32 %v1179, %v1311
  %v1313 = vpop.f32.mrb[0].mxu0
  %v1314 = vadd.f32 %v1181, %v1313
  %1315 = vmatprep.mubr.bf16.mxu0 0
  %1316 = vmatmul.mubr.bf16.gmra.mrb[0].mxu0 %v792
  %v1317 = vpop.f32.mrb[0].mxu0
  %v1318 = vadd.f32 %v1185, %v1317
  %v1319 = vpop.f32.mrb[0].mxu0
  %v1320 = vadd.f32 %v1187, %v1319
  %v1321 = vpop.f32.mrb[0].mxu0
  %v1322 = vadd.f32 %v1189, %v1321
  %v1323 = vpop.f32.mrb[0].mxu0
  %v1324 = vadd.f32 %v1191, %v1323
  %1325 = vdwg.mxu0
  %v1326 = vmax.f32 %v962, 0.0
  %v1327 = vmax.f32 %v964, 0.0
  %v1328 = vmax.f32 %v1228, 0.0
  %v1329 = vmax.f32 %v1230, 0.0
  %v1330 = vmax.f32 %v966, 0.0
  %v1331 = vmax.f32 %v968, 0.0
  %v1332 = vmax.f32 %v1232, 0.0
  %v1333 = vmax.f32 %v1234, 0.0
  %v1334 = vmax.f32 %v972, 0.0
  %v1335 = vmax.f32 %v974, 0.0
  %v1336 = vmax.f32 %v1238, 0.0
  %v1337 = vmax.f32 %v1240, 0.0
  %v1338 = vmax.f32 %v976, 0.0
  %v1339 = vmax.f32 %v978, 0.0
  %v1340 = vmax.f32 %v1242, 0.0
  %v1341 = vmax.f32 %v1244, 0.0
  %v1342 = vmax.f32 %v982, 0.0
  %v1343 = vmax.f32 %v984, 0.0
  %v1344 = vmax.f32 %v1248, 0.0
  %v1345 = vmax.f32 %v1250, 0.0
  %v1346 = vmax.f32 %v986, 0.0
  %v1347 = vmax.f32 %v988, 0.0
  %v1348 = vmax.f32 %v1252, 0.0
  %v1349 = vmax.f32 %v1254, 0.0
  %v1350 = vmax.f32 %v992, 0.0
  %v1351 = vmax.f32 %v994, 0.0
  %v1352 = vmax.f32 %v1258, 0.0
  %v1353 = vmax.f32 %v1260, 0.0
  %v1354 = vmax.f32 %v996, 0.0
  %v1355 = vmax.f32 %v998, 0.0
  %v1356 = vmax.f32 %v1262, 0.0
  %v1357 = vmax.f32 %v1264, 0.0
  %v1358 = vmax.f32 %v1002, 0.0
  %v1359 = vmax.f32 %v1004, 0.0
  %v1360 = vmax.f32 %v1268, 0.0
  %v1361 = vmax.f32 %v1270, 0.0
  %v1362 = vmax.f32 %v1006, 0.0
  %v1363 = vmax.f32 %v1008, 0.0
  %v1364 = vmax.f32 %v1272, 0.0
  %v1365 = vmax.f32 %v1274, 0.0
  %v1366 = vmax.f32 %v1012, 0.0
  %v1367 = vmax.f32 %v1014, 0.0
  %v1368 = vmax.f32 %v1278, 0.0
  %v1369 = vmax.f32 %v1280, 0.0
  %v1370 = vmax.f32 %v1016, 0.0
  %v1371 = vmax.f32 %v1018, 0.0
  %v1372 = vmax.f32 %v1282, 0.0
  %v1373 = vmax.f32 %v1284, 0.0
  %v1374 = vmax.f32 %v1022, 0.0
  %v1375 = vmax.f32 %v1024, 0.0
  %v1376 = vmax.f32 %v1288, 0.0
  %v1377 = vmax.f32 %v1290, 0.0
  %v1378 = vmax.f32 %v1026, 0.0
  %v1379 = vmax.f32 %v1028, 0.0
  %v1380 = vmax.f32 %v1292, 0.0
  %v1381 = vmax.f32 %v1294, 0.0
  %v1382 = vmax.f32 %v1032, 0.0
  %v1383 = vmax.f32 %v1034, 0.0
  %v1384 = vmax.f32 %v1298, 0.0
  %v1385 = vmax.f32 %v1300, 0.0
  %v1386 = vmax.f32 %v1036, 0.0
  %v1387 = vmax.f32 %v1038, 0.0
  %v1388 = vmax.f32 %v1302, 0.0
  %v1389 = vmax.f32 %v1304, 0.0
  %v1390 = vmax.f32 %v1042, 0.0
  %v1391 = vmax.f32 %v1044, 0.0
  %v1392 = vmax.f32 %v1308, 0.0
  %v1393 = vmax.f32 %v1310, 0.0
  %v1394 = vmax.f32 %v1046, 0.0
  %v1395 = vmax.f32 %v1048, 0.0
  %v1396 = vmax.f32 %v1312, 0.0
  %v1397 = vmax.f32 %v1314, 0.0
  %v1398 = vmax.f32 %v1052, 0.0
  %v1399 = vmax.f32 %v1054, 0.0
  %v1400 = vmax.f32 %v1318, 0.0
  %v1401 = vmax.f32 %v1320, 0.0
  %v1402 = vmax.f32 %v1056, 0.0
  %v1403 = vmax.f32 %v1058, 0.0
  %v1404 = vmax.f32 %v1322, 0.0
  %v1405 = vmax.f32 %v1324, 0.0
  %v1406 = vld [vmem:[%s3] sm:$0xff]
  %v1407 = vld [vmem:[%s3 + $0x8] sm:$0xff]
  %v1408 = vpack.c.bf16 %v1330, %v1326
  %v1409 = vpack.c.bf16 %v1331, %v1327
  %v1410 = vpack.c.bf16 %v1332, %v1328
  %v1411 = vpack.c.bf16 %v1333, %v1329
  %v1412 = vpack.c.bf16 %v1338, %v1334
  %v1413 = vpack.c.bf16 %v1339, %v1335
  %v1414 = vpack.c.bf16 %v1340, %v1336
  %v1415 = vpack.c.bf16 %v1341, %v1337
  %v1416 = vpack.c.bf16 %v1346, %v1342
  %v1417 = vpack.c.bf16 %v1347, %v1343
  %v1418 = vpack.c.bf16 %v1348, %v1344
  %v1419 = vpack.c.bf16 %v1349, %v1345
  %v1420 = vpack.c.bf16 %v1354, %v1350
  %v1421 = vpack.c.bf16 %v1355, %v1351
  %v1422 = vpack.c.bf16 %v1356, %v1352
  %v1423 = vpack.c.bf16 %v1357, %v1353
  %v1424 = vpack.c.bf16 %v1362, %v1358
  %v1425 = vpack.c.bf16 %v1363, %v1359
  %v1426 = vpack.c.bf16 %v1364, %v1360
  %v1427 = vpack.c.bf16 %v1365, %v1361
  %v1428 = vpack.c.bf16 %v1370, %v1366
  %v1429 = vpack.c.bf16 %v1371, %v1367
  %v1430 = vpack.c.bf16 %v1372, %v1368
  %v1431 = vpack.c.bf16 %v1373, %v1369
  %v1432 = vpack.c.bf16 %v1378, %v1374
  %v1433 = vpack.c.bf16 %v1379, %v1375
  %v1434 = vpack.c.bf16 %v1380, %v1376
  %v1435 = vpack.c.bf16 %v1381, %v1377
  %v1436 = vpack.c.bf16 %v1386, %v1382
  %v1437 = vpack.c.bf16 %v1387, %v1383
  %v1438 = vpack.c.bf16 %v1388, %v1384
  %v1439 = vpack.c.bf16 %v1389, %v1385
  %v1440 = vpack.c.bf16 %v1394, %v1390
  %v1441 = vpack.c.bf16 %v1395, %v1391
  %v1442 = vpack.c.bf16 %v1396, %v1392
  %v1443 = vpack.c.bf16 %v1397, %v1393
  %v1444 = vpack.c.bf16 %v1402, %v1398
  %v1445 = vpack.c.bf16 %v1403, %v1399
  %v1446 = vpack.c.bf16 %v1404, %v1400
  %v1447 = vpack.c.bf16 %v1405, %v1401
  %v1448 = vld [vmem:[%s4] sm:$0xff]
  %v1449 = vld [vmem:[%s4 + $0x8] sm:$0xff]
  %1451 = vset.pattern.permute.xlu0 0
  %1452 = vperm.xlu0 %1451, %v1448
  %v1453 = vpop.permute.xlu0 %1452
  %1456 = vset.pattern.permute.xlu0 0
  %1457 = vperm.xlu0 %1456, %v1449
  %v1458 = vpop.permute.xlu0 %1457
  %v1462 = vunpack.c.l.b16 %v1406
  %v1463 = vunpack.c.h.b16 %v1406
  %v1464 = vunpack.c.l.b16 %v1407
  %v1465 = vunpack.c.h.b16 %v1407
  %v1466 = vpack.c.b16 %v1464, %v1462
  %v1467 = vpack.c.b16 %v1465, %v1463
  %v1470 = vsel %vm763, %v1467, 0
  %1472 = vmatprep.subr.bf16.mxu0 %v1409
  %1473 = vmatpush1.bf16.msra.mxu0 %v1408
  %1474 = vmatprep.subr.bf16.mxu0 %v1413
  %1475 = vmatpush1.bf16.msra.mxu0 %v1412
  %1476 = vmatprep.subr.bf16.mxu0 %v1417
  %1477 = vmatpush1.bf16.msra.mxu0 %v1416
  %1478 = vmatprep.subr.bf16.mxu0 %v1421
  %1479 = vmatpush1.bf16.msra.mxu0 %v1420
  %1480 = vmatprep.subr.bf16.mxu0 %v1425
  %1481 = vmatpush1.bf16.msra.mxu0 %v1424
  %1482 = vmatprep.subr.bf16.mxu0 %v1429
  %1483 = vmatpush1.bf16.msra.mxu0 %v1428
  %1484 = vmatprep.subr.bf16.mxu0 %v1433
  %1485 = vmatpush1.bf16.msra.mxu0 %v1432
  %1486 = vmatprep.subr.bf16.mxu0 %v1437
  %1487 = vmatpush1.bf16.msra.mxu0 %v1436
  %1488 = vmatprep.subr.bf16.mxu0 %v1441
  %1489 = vmatpush1.bf16.msra.mxu0 %v1440
  %1490 = vmatprep.subr.bf16.mxu0 %v1445
  %1491 = vmatpush1.bf16.msra.mxu0 %v1444
  %1492 = vmatprep.subr.bf16.mxu0 0
  %1493 = vmatpush1.bf16.msra.mxu0 0
  %1494 = vmatprep.subr.bf16.mxu0 0
  %1495 = vmatpush1.bf16.msra.mxu0 0
  %1496 = vmatprep.subr.bf16.mxu0 0
  %1497 = vmatpush1.bf16.msra.mxu0 0
  %1498 = vmatprep.subr.bf16.mxu0 0
  %1499 = vmatpush1.bf16.msra.mxu0 0
  %1500 = vmatprep.subr.bf16.mxu0 0
  %1501 = vmatpush1.bf16.msra.mxu0 0
  %1502 = vmatprep.subr.bf16.mxu0 0
  %1503 = vmatpush1.bf16.msra.mxu0 0
  %1504 = vmatprep.mubr.bf16.mxu0 %v1470
  %1505 = vmatmul.mubr.bf16.gmra.mrb[0].mxu0 %v1466
  %v1506 = vpop.f32.mrb[0].mxu0
  %v1507 = vadd.f32 %v1453, %v1506
  %v1508 = vpop.f32.mrb[0].mxu0
  %v1509 = vadd.f32 %v1453, %v1508
  %v1510 = vpop.f32.mrb[0].mxu0
  %v1511 = vadd.f32 %v1458, %v1510
  %v1512 = vpop.f32.mrb[0].mxu0
  %v1513 = vadd.f32 %v1458, %v1512
  %1514 = vdwg.mxu0
  %1515 = vmatprep.subr.bf16.mxu0 %v1411
  %1516 = vmatpush1.bf16.msra.mxu0 %v1410
  %1517 = vmatprep.subr.bf16.mxu0 %v1415
  %1518 = vmatpush1.bf16.msra.mxu0 %v1414
  %1519 = vmatprep.subr.bf16.mxu0 %v1419
  %1520 = vmatpush1.bf16.msra.mxu0 %v1418
  %1521 = vmatprep.subr.bf16.mxu0 %v1423
  %1522 = vmatpush1.bf16.msra.mxu0 %v1422
  %1523 = vmatprep.subr.bf16.mxu0 %v1427
  %1524 = vmatpush1.bf16.msra.mxu0 %v1426
  %1525 = vmatprep.subr.bf16.mxu0 %v1431
  %1526 = vmatpush1.bf16.msra.mxu0 %v1430
  %1527 = vmatprep.subr.bf16.mxu0 %v1435
  %1528 = vmatpush1.bf16.msra.mxu0 %v1434
  %1529 = vmatprep.subr.bf16.mxu0 %v1439
  %1530 = vmatpush1.bf16.msra.mxu0 %v1438
  %1531 = vmatprep.subr.bf16.mxu0 %v1443
  %1532 = vmatpush1.bf16.msra.mxu0 %v1442
  %1533 = vmatprep.subr.bf16.mxu0 %v1447
  %1534 = vmatpush1.bf16.msra.mxu0 %v1446
  %1535 = vmatprep.subr.bf16.mxu0 0
  %1536 = vmatpush1.bf16.msra.mxu0 0
  %1537 = vmatprep.subr.bf16.mxu0 0
  %1538 = vmatpush1.bf16.msra.mxu0 0
  %1539 = vmatprep.subr.bf16.mxu0 0
  %1540 = vmatpush1.bf16.msra.mxu0 0
  %1541 = vmatprep.subr.bf16.mxu0 0
  %1542 = vmatpush1.bf16.msra.mxu0 0
  %1543 = vmatprep.subr.bf16.mxu0 0
  %1544 = vmatpush1.bf16.msra.mxu0 0
  %1545 = vmatprep.subr.bf16.mxu0 0
  %1546 = vmatpush1.bf16.msra.mxu0 0
  %1547 = vmatprep.mubr.bf16.mxu0 %v1470
  %1548 = vmatmul.mubr.bf16.gmra.mrb[0].mxu0 %v1466
  %v1549 = vpop.f32.mrb[0].mxu0
  %v1550 = vadd.f32 %v1453, %v1549
  %v1551 = vpop.f32.mrb[0].mxu0
  %v1552 = vadd.f32 %v1453, %v1551
  %v1553 = vpop.f32.mrb[0].mxu0
  %v1554 = vadd.f32 %v1458, %v1553
  %v1555 = vpop.f32.mrb[0].mxu0
  %v1556 = vadd.f32 %v1458, %v1555
  %1557 = vdwg.mxu0
  %1558 = vst [vmem:[%s5] sm:$0xff] %v1507
  %1559 = vst [vmem:[%s5 + $0x8] sm:$0xff] %v1509
  %1560 = vst [vmem:[%s5 + $0x10] sm:$0xff] %v1550
  %1561 = vst [vmem:[%s5 + $0x18] sm:$0xff] %v1552
  %1562 = vst [vmem:[%s5 + $0x20] sm:$0xff] %v1511
  %1563 = vst [vmem:[%s5 + $0x28] sm:$0xff] %v1513
  %1564 = vst [vmem:[%s5 + $0x30] sm:$0xff] %v1554
  %1565 = vst [vmem:[%s5 + $0x38] sm:$0xff] %v1556
  // Predicated region
  $region22: #{det_head_forward.1} parent=0 // pred_check
    _
  $region23: #{det_head_forward.1} parent=0 // pred_check_branch
    %1567 = sbr.rel (0) target = $region25
  $region24: #{det_head_forward.1} parent=0 // pred_region
    _
  $region25: #{det_head_forward.1} parent=0 // pred_fallthru
    _
  // Predicated region
  $region26: #{det_head_forward.1} parent=0 // pred_check
    _
  $region27: #{det_head_forward.1} parent=0 // pred_check_branch
    %1569 = sbr.rel (0) target = $region29
  $region28: #{det_head_forward.1} parent=0 // pred_region
    _
  $region29: #{det_head_forward.1} parent=0 // pred_fallthru
    _

</llo_original>
